<compile_context>
chip_gen: v7x
topology: tpu7x:2x2x1
jax: 0.10.0
libtpu: 0.0.40
codegen_flags: <defaults>
</compile_context>

<pallas_src>
import functools

import jax
import jax.numpy as jnp
from jax.experimental import pallas as pl
from jax.experimental.pallas import tpu as pltpu

HIDDEN = 64


def _round_up(x, m):
    return (x + m - 1) // m * m


def mamlp_kernel(x_ref, w1_ref, b1_ref, w2_ref, b2_ref, w3_ref, b3_ref,
                 out_ref):
    # fc1 + relu: single (tb, 36) @ (36, 128) matmul, f32 accumulate/epilogue.
    h1 = jnp.dot(x_ref[...], w1_ref[...], preferred_element_type=jnp.float32)
    h1 = jnp.maximum(h1 + b1_ref[...], 0.0)

    # fc2 + relu
    h2 = jnp.dot(h1.astype(w2_ref.dtype), w2_ref[...],
                 preferred_element_type=jnp.float32)
    h2 = jnp.maximum(h2 + b2_ref[...], 0.0)

    # fc3 (no activation); narrow (n_actions-wide) store.
    h3 = jnp.dot(h2.astype(w3_ref.dtype), w3_ref[...],
                 preferred_element_type=jnp.float32)
    out_ref[...] = (h3 + b3_ref[...]).astype(out_ref.dtype)


def prepare_params(params, compute_dtype=jnp.bfloat16):
    """One-time weight preprocessing: pad hidden dim to 128, cast matmul
    operands to compute_dtype, keep biases f32 (f32 epilogue).  Hoisted out of
    the per-call forward path."""
    w1, b1, w2, b2, w3, b3 = params
    h_pad = _round_up(HIDDEN, 128)   # 128

    def pad2(a, r, c):
        return jnp.pad(a, ((0, r - a.shape[0]), (0, c - a.shape[1])))

    w1p = pad2(w1, w1.shape[0], h_pad).astype(compute_dtype)   # (d_in, 128)
    b1p = pad2(b1, 1, h_pad).astype(jnp.float32)               # (1, 128)
    w2p = pad2(w2, h_pad, h_pad).astype(compute_dtype)         # (128, 128)
    b2p = pad2(b2, 1, h_pad).astype(jnp.float32)               # (1, 128)
    w3p = pad2(w3, h_pad, w3.shape[1]).astype(compute_dtype)   # (128, n_out)
    b3p = b3.astype(jnp.float32)                               # (1, n_out)
    return (w1p, b1p, w2p, b2p, w3p, b3p)


@functools.partial(jax.jit, static_argnames=("tile_b",))
def mamlp_forward(obs_i, obs_others, act_others, prepped, *, tile_b=2048):
    w1p, b1p, w2p, b2p, w3p, b3p = prepped
    B = obs_i.shape[0]
    d_in = w1p.shape[0]
    n_out = w3p.shape[1]
    compute_dtype = w1p.dtype

    # Single fused concat + cast in the wrapper (removes the in-kernel
    # lane-dim concat AND two of the three fc1 matmuls / DMA streams).
    x = jnp.concatenate([obs_i, obs_others, act_others],
                        axis=1).astype(compute_dtype)
    assert x.shape[1] == d_in

    # ---- batch tiling ----
    b_up = _round_up(B, 8)
    tb = min(tile_b, b_up)
    # For large batches keep >= 4 grid steps so the v7x megacore can shard the
    # "parallel" batch axis across both TensorCores (no-op on v5e/v6e).
    if b_up >= 4 * 128:
        tb = min(tb, _round_up(-(-b_up // 4), 8))
    b_pad = _round_up(B, tb)
    if b_pad != B:
        x = jnp.pad(x, ((0, b_pad - B), (0, 0)))
    grid = (b_pad // tb,)

    const_spec = lambda shape: pl.BlockSpec(shape, lambda i: (0, 0))

    out_padded = pl.pallas_call(
        mamlp_kernel,
        out_shape=jax.ShapeDtypeStruct((b_pad, n_out), jnp.float32),
        grid=grid,
        in_specs=[
            pl.BlockSpec((tb, d_in), lambda i: (i, 0)),   # x   (double-buffered)
            const_spec(w1p.shape),                        # w1  (VMEM-resident)
            const_spec(b1p.shape),                        # b1
            const_spec(w2p.shape),                        # w2
            const_spec(b2p.shape),                        # b2
            const_spec(w3p.shape),                        # w3
            const_spec(b3p.shape),                        # b3
        ],
        out_specs=pl.BlockSpec((tb, n_out), lambda i: (i, 0)),
        compiler_params=pltpu.CompilerParams(
            dimension_semantics=("parallel",),
            vmem_limit_bytes=48 * 1024 * 1024),
    )(x, w1p, b1p, w2p, b2p, w3p, b3p)

    return out_padded[:B]


def init_params(key, obs_shape, n_actions):
    """nn.Linear-style init; weights stored as (in, out) so y = x @ W + b."""
    d_in = obs_shape + obs_shape + n_actions
    k1, k2, k3, k4, k5, k6 = jax.random.split(key, 6)

    def uniform(k, shape, fan_in):
        bound = 1.0 / jnp.sqrt(fan_in)
        return jax.random.uniform(k, shape, jnp.float32, -bound, bound)

    w1 = uniform(k1, (d_in, HIDDEN), d_in)
    b1 = uniform(k2, (1, HIDDEN), d_in)
    w2 = uniform(k3, (HIDDEN, HIDDEN), HIDDEN)
    b2 = uniform(k4, (1, HIDDEN), HIDDEN)
    w3 = uniform(k5, (HIDDEN, n_actions), HIDDEN)
    b3 = uniform(k6, (1, n_actions), HIDDEN)
    return (w1, b1, w2, b2, w3, b3)


def reference_forward(obs_i, obs_others, act_others, params):
    w1, b1, w2, b2, w3, b3 = params
    x = jnp.concatenate([obs_i, obs_others, act_others], axis=1)
    h1 = jnp.maximum(x @ w1 + b1, 0.0)
    h2 = jnp.maximum(h1 @ w2 + b2, 0.0)
    return h2 @ w3 + b3


if __name__ == "__main__":
    OBS, NACT = 16, 4
    key = jax.random.PRNGKey(0)
    kp, ki, ko, ka = jax.random.split(key, 4)
    params = init_params(kp, OBS, NACT)

    # --- f32 path, small batch: tight correctness check ---
    prepped_f32 = prepare_params(params, compute_dtype=jnp.float32)
    B = 2
    obs_i = jax.random.normal(ki, (B, OBS), jnp.float32)
    obs_others = jax.random.normal(ko, (B, OBS), jnp.float32)
    act_others = jax.random.normal(ka, (B, NACT), jnp.float32)
    out = jax.block_until_ready(
        mamlp_forward(obs_i, obs_others, act_others, prepped_f32))
    ref = reference_forward(obs_i, obs_others, act_others, params)
    assert out.shape == (B, NACT)
    assert jnp.allclose(out, ref, atol=1e-4, rtol=1e-4)

    # --- default bf16 path, multi-block grid + ragged tail ---
    prepped_bf16 = prepare_params(params)        # bf16 matmul operands
    B2 = 300
    ki2, ko2, ka2 = jax.random.split(jax.random.PRNGKey(1), 3)
    obs_i2 = jax.random.normal(ki2, (B2, OBS), jnp.float32)
    obs_o2 = jax.random.normal(ko2, (B2, OBS), jnp.float32)
    act_o2 = jax.random.normal(ka2, (B2, NACT), jnp.float32)
    out2 = jax.block_until_ready(
        mamlp_forward(obs_i2, obs_o2, act_o2, prepped_bf16, tile_b=128))
    ref2 = reference_forward(obs_i2, obs_o2, act_o2, params)
    assert out2.shape == (B2, NACT)
    assert jnp.allclose(out2, ref2, atol=5e-2, rtol=5e-2)   # bf16 tolerance

    # --- large batch, default tile: exercises the >=4-step grid path ---
    B3 = 2048
    ki3, ko3, ka3 = jax.random.split(jax.random.PRNGKey(2), 3)
    obs_i3 = jax.random.normal(ki3, (B3, OBS), jnp.float32)
    obs_o3 = jax.random.normal(ko3, (B3, OBS), jnp.float32)
    act_o3 = jax.random.normal(ka3, (B3, NACT), jnp.float32)
    out3 = jax.block_until_ready(
        mamlp_forward(obs_i3, obs_o3, act_o3, prepped_bf16))
    ref3 = reference_forward(obs_i3, obs_o3, act_o3, params)
    assert out3.shape == (B3, NACT)
    assert jnp.allclose(out3, ref3, atol=5e-2, rtol=5e-2)   # bf16 tolerance

    print("KERNEL_OK")
</pallas_src>

<mosaic_0001>
module attributes {stable_mosaic.version = 11 : i64} {
  func.func @mamlp_kernel(%arg0: i32, %arg1: memref<8x36xf32, #tpu.memory_space<vmem>>, %arg2: memref<36x128xf32, #tpu.memory_space<vmem>>, %arg3: memref<1x128xf32, #tpu.memory_space<vmem>>, %arg4: memref<128x128xf32, #tpu.memory_space<vmem>>, %arg5: memref<1x128xf32, #tpu.memory_space<vmem>>, %arg6: memref<128x4xf32, #tpu.memory_space<vmem>>, %arg7: memref<1x4xf32, #tpu.memory_space<vmem>>, %arg8: memref<8x4xf32, #tpu.memory_space<vmem>>) attributes {dimension_semantics = [#tpu.dimension_semantics<parallel>], iteration_bounds = array<i64: 1>, scalar_prefetch = 0 : i64, scratch_operands = 0 : i64, tpu.core_type = #tpu.core_type<tc>, window_params = [{transform_indices = @transform_0, window_bounds = array<i64: 8, 36>}, {pipeline_mode = #tpu.pipeline_mode<synchronous>, transform_indices = @transform_1, window_bounds = array<i64: 36, 128>}, {pipeline_mode = #tpu.pipeline_mode<synchronous>, transform_indices = @transform_2, window_bounds = array<i64: 1, 128>}, {pipeline_mode = #tpu.pipeline_mode<synchronous>, transform_indices = @transform_3, window_bounds = array<i64: 128, 128>}, {pipeline_mode = #tpu.pipeline_mode<synchronous>, transform_indices = @transform_4, window_bounds = array<i64: 1, 128>}, {pipeline_mode = #tpu.pipeline_mode<synchronous>, transform_indices = @transform_5, window_bounds = array<i64: 128, 4>}, {pipeline_mode = #tpu.pipeline_mode<synchronous>, transform_indices = @transform_6, window_bounds = array<i64: 1, 4>}, {transform_indices = @transform_7, window_bounds = array<i64: 8, 4>}]} {
    %c0 = arith.constant 0 : index
    %c0_0 = arith.constant 0 : index
    %0 = vector.load %arg1[%c0, %c0_0] : memref<8x36xf32, #tpu.memory_space<vmem>>, vector<8x36xf32>
    %c0_1 = arith.constant 0 : index
    %c0_2 = arith.constant 0 : index
    %1 = vector.load %arg2[%c0_1, %c0_2] : memref<36x128xf32, #tpu.memory_space<vmem>>, vector<36x128xf32>
    %cst = arith.constant dense<0.000000e+00> : vector<8x128xf32>
    %2 = tpu.matmul %0, %1, %cst {dimension_numbers = #tpu.dot_dimension_numbers<[1], [0], [0], [1], [0, 0, 1, 1], [], []>} : vector<8x36xf32>, vector<36x128xf32>, vector<8x128xf32> -> vector<8x128xf32>
    %c0_3 = arith.constant 0 : index
    %c0_4 = arith.constant 0 : index
    %3 = vector.load %arg3[%c0_3, %c0_4] : memref<1x128xf32, #tpu.memory_space<vmem>>, vector<1x128xf32>
    %4 = vector.broadcast %3 : vector<1x128xf32> to vector<8x128xf32>
    %5 = arith.addf %2, %4 : vector<8x128xf32>
    %cst_5 = arith.constant 0.000000e+00 : f32
    %6 = vector.broadcast %cst_5 : f32 to vector<8x128xf32>
    %7 = arith.maximumf %5, %6 : vector<8x128xf32>
    %c0_6 = arith.constant 0 : index
    %c0_7 = arith.constant 0 : index
    %8 = vector.load %arg4[%c0_6, %c0_7] : memref<128x128xf32, #tpu.memory_space<vmem>>, vector<128x128xf32>
    %cst_8 = arith.constant dense<0.000000e+00> : vector<8x128xf32>
    %9 = tpu.matmul %7, %8, %cst_8 {dimension_numbers = #tpu.dot_dimension_numbers<[1], [0], [0], [1], [0, 0, 1, 1], [], []>} : vector<8x128xf32>, vector<128x128xf32>, vector<8x128xf32> -> vector<8x128xf32>
    %c0_9 = arith.constant 0 : index
    %c0_10 = arith.constant 0 : index
    %10 = vector.load %arg5[%c0_9, %c0_10] : memref<1x128xf32, #tpu.memory_space<vmem>>, vector<1x128xf32>
    %11 = vector.broadcast %10 : vector<1x128xf32> to vector<8x128xf32>
    %12 = arith.addf %9, %11 : vector<8x128xf32>
    %cst_11 = arith.constant 0.000000e+00 : f32
    %13 = vector.broadcast %cst_11 : f32 to vector<8x128xf32>
    %14 = arith.maximumf %12, %13 : vector<8x128xf32>
    %c0_12 = arith.constant 0 : index
    %c0_13 = arith.constant 0 : index
    %15 = vector.load %arg6[%c0_12, %c0_13] : memref<128x4xf32, #tpu.memory_space<vmem>>, vector<128x4xf32>
    %cst_14 = arith.constant dense<0.000000e+00> : vector<8x4xf32>
    %16 = tpu.matmul %14, %15, %cst_14 {dimension_numbers = #tpu.dot_dimension_numbers<[1], [0], [0], [1], [0, 0, 1, 1], [], []>} : vector<8x128xf32>, vector<128x4xf32>, vector<8x4xf32> -> vector<8x4xf32>
    %c0_15 = arith.constant 0 : index
    %c0_16 = arith.constant 0 : index
    %17 = vector.load %arg7[%c0_15, %c0_16] : memref<1x4xf32, #tpu.memory_space<vmem>>, vector<1x4xf32>
    %18 = vector.broadcast %17 : vector<1x4xf32> to vector<8x4xf32>
    %19 = arith.addf %16, %18 : vector<8x4xf32>
    %c0_17 = arith.constant 0 : index
    %c0_18 = arith.constant 0 : index
    %20 = vector.load %arg8[%c0_17, %c0_18] : memref<8x4xf32, #tpu.memory_space<vmem>>, vector<8x4xf32>
    tpu.vector_store %arg8[%c0_17, %c0_18], %19 {strides = array<i32>} : memref<8x4xf32, #tpu.memory_space<vmem>>, vector<8x4xf32>,
    return
  }
  func.func @transform_0(%arg0: i32) -> (i32, i32) {
    %c0_i32 = arith.constant 0 : i32
    %c0_i32_0 = arith.constant 0 : i32
    return %arg0, %c0_i32 : i32, i32
  }
  func.func @transform_1(%arg0: i32) -> (i32, i32) {
    %c0_i32 = arith.constant 0 : i32
    %c0_i32_0 = arith.constant 0 : i32
    %c0_i32_1 = arith.constant 0 : i32
    return %c0_i32, %c0_i32_0 : i32, i32
  }
  func.func @transform_2(%arg0: i32) -> (i32, i32) {
    %c0_i32 = arith.constant 0 : i32
    %c0_i32_0 = arith.constant 0 : i32
    %c0_i32_1 = arith.constant 0 : i32
    return %c0_i32, %c0_i32_0 : i32, i32
  }
  func.func @transform_3(%arg0: i32) -> (i32, i32) {
    %c0_i32 = arith.constant 0 : i32
    %c0_i32_0 = arith.constant 0 : i32
    %c0_i32_1 = arith.constant 0 : i32
    return %c0_i32, %c0_i32_0 : i32, i32
  }
  func.func @transform_4(%arg0: i32) -> (i32, i32) {
    %c0_i32 = arith.constant 0 : i32
    %c0_i32_0 = arith.constant 0 : i32
    %c0_i32_1 = arith.constant 0 : i32
    return %c0_i32, %c0_i32_0 : i32, i32
  }
  func.func @transform_5(%arg0: i32) -> (i32, i32) {
    %c0_i32 = arith.constant 0 : i32
    %c0_i32_0 = arith.constant 0 : i32
    %c0_i32_1 = arith.constant 0 : i32
    return %c0_i32, %c0_i32_0 : i32, i32
  }
  func.func @transform_6(%arg0: i32) -> (i32, i32) {
    %c0_i32 = arith.constant 0 : i32
    %c0_i32_0 = arith.constant 0 : i32
    %c0_i32_1 = arith.constant 0 : i32
    return %c0_i32, %c0_i32_0 : i32, i32
  }
  func.func @transform_7(%arg0: i32) -> (i32, i32) {
    %c0_i32 = arith.constant 0 : i32
    %c0_i32_0 = arith.constant 0 : i32
    return %arg0, %c0_i32 : i32, i32
  }
}

</mosaic_0001>

<llo_original>
// kernel: mamlp_forward.1
$region0: #{mamlp_forward.1}
  #allocation0 [shape = 'u32[]', space=smem, size = 0x4, offset = 0x4, fixed_abs, tag = 'smem constant byte address 0x4 - core index']
  #allocation1 [shape = 'u32[144,128]{1,0:T(1,128)}', space=vmem, size = 0x12000, scoped, tag = 'internal scratch']
  %s0 = inlined_call_operand.vmem [shape: f32[8,36], index: 0, kind: input, shape index: {}]
  %s1 = inlined_call_operand.hbm [shape: f32[36,128], index: 1, kind: input, shape index: {}]
  %s2 = inlined_call_operand.vmem [shape: f32[1,128], index: 2, kind: input, shape index: {}]
  %s3 = inlined_call_operand.vmem [shape: f32[128,128], index: 3, kind: input, shape index: {}]
  %s4 = inlined_call_operand.vmem [shape: f32[1,128], index: 4, kind: input, shape index: {}]
  %s5 = inlined_call_operand.vmem [shape: f32[128,4], index: 5, kind: input, shape index: {}]
  %s6 = inlined_call_operand.vmem [shape: f32[1,4], index: 6, kind: input, shape index: {}]
  %s7 = inlined_call_operand.vmem [shape: f32[8,4], index: 7, kind: output, shape index: {}]
  %s8 = sld [smem:[#allocation0]]
  $region42: #{mamlp_forward.1} parent=0
    _
  %s10 = ssub.s32 1, %s8
  %s11 = scalar_select 0, %s10, %s8
  $region1: #{mamlp_forward.1} parent=0
    #allocation2 [shape = 'u8[20480]{0}', space=vmem, size = 0x5000, scoped, tag = 'input window, operand 1, single buffered']
    #allocation3 [shape = 's32[1]{0}', space=sflag, size = 0x4, scoped, tag = 'scoped memory for mamlp_forward.1']
    %12 = vsyncpa [#allocation3], 0
    // Predicated region
    $region2: #{mamlp_forward.1} parent=1 // pred_check
      _
    $region3: #{mamlp_forward.1} parent=1 // pred_check_branch
      %14 = sbr.rel (0) target = $region5
    $region4: #{mamlp_forward.1} parent=1 // pred_region
      _
    $region5: #{mamlp_forward.1} parent=1 // pred_fallthru
      _
    // Predicated region
    $region6: #{mamlp_forward.1} parent=1 // pred_check
      _
    $region7: #{mamlp_forward.1} parent=1 // pred_check_branch
      %16 = sbr.rel (0) target = $region9
    $region8: #{mamlp_forward.1} parent=1 // pred_region
      %s18 = ssub.s32 640, 640
      %19 = vsyncadd [#allocation3], %s18
      %s20 = sshll.u32 [#allocation2], 4
      %s21 = int_to_ptr.vmem [resolvable:$true] %s20
      %26 = dma.hbm_to_vmem [thread:$0]  %s1, 640, %s21, [#allocation3], 128, 128, 8
    $region9: #{mamlp_forward.1} parent=1 // pred_fallthru
      _
    // Predicated region
    $region10: #{mamlp_forward.1} parent=1 // pred_check
      _
    $region11: #{mamlp_forward.1} parent=1 // pred_check_branch
      %28 = sbr.rel (0) target = $region13
    $region12: #{mamlp_forward.1} parent=1 // pred_region
      _
    $region13: #{mamlp_forward.1} parent=1 // pred_fallthru
      _
    // Predicated region
    $region14: #{mamlp_forward.1} parent=1 // pred_check
      _
    $region15: #{mamlp_forward.1} parent=1 // pred_check_branch
      %30 = sbr.rel (0) target = $region17
    $region16: #{mamlp_forward.1} parent=1 // pred_region
      _
    $region17: #{mamlp_forward.1} parent=1 // pred_fallthru
      _
    // Predicated region
    $region18: #{mamlp_forward.1} parent=1 // pred_check
      _
    $region19: #{mamlp_forward.1} parent=1 // pred_check_branch
      %32 = sbr.rel (0) target = $region21
    $region20: #{mamlp_forward.1} parent=1 // pred_region
      _
    $region21: #{mamlp_forward.1} parent=1 // pred_fallthru
      _
    // Predicated region
    $region22: #{mamlp_forward.1} parent=1 // pred_check
      _
    $region23: #{mamlp_forward.1} parent=1 // pred_check_branch
      %34 = sbr.rel (0) target = $region25
    $region24: #{mamlp_forward.1} parent=1 // pred_region
      _
    $region25: #{mamlp_forward.1} parent=1 // pred_fallthru
      _
    // Predicated region
    $region26: #{mamlp_forward.1} parent=1 // pred_check
      _
    $region27: #{mamlp_forward.1} parent=1 // pred_check_branch
      %36 = sbr.rel (0) target = $region29
    $region28: #{mamlp_forward.1} parent=1 // pred_region
      _
    $region29: #{mamlp_forward.1} parent=1 // pred_fallthru
      _
    // Predicated region
    $region30: #{mamlp_forward.1} parent=1 // pred_check
      _
    $region31: #{mamlp_forward.1} parent=1 // pred_check_branch
      %38 = sbr.rel (0) target = $region33
    $region32: #{mamlp_forward.1} parent=1 // pred_region
      %39 = dma.done [#allocation3], 640
    $region33: #{mamlp_forward.1} parent=1 // pred_fallthru
      _
    %v40 = vld [vmem:[%s0] sm:$0xff]
    %v41 = vld [vmem:[#allocation2] sm:$0xff]
    %v42 = vld [vmem:[#allocation2 + $0x8] sm:$0xff]
    %v43 = vld [vmem:[#allocation2 + $0x10] sm:$0xff]
    %v44 = vld [vmem:[#allocation2 + $0x18] sm:$0xff]
    %v45 = vld [vmem:[#allocation2 + $0x20] sm:$0xf]
    %v46 = vld [vmem:[%s2] sm:$0x1]
    %v48 = vlaneseq
    %v49 = vshrl.u32 %v48, 7
    %v50 = vsub.s32 0, %v49
    %v51 = vrot.slane %v46, %v50
    %vm53 = vcmask 293888
    %v55 = vsel %vm53, %v40, 0
    %vm57 = vcmask 1043456
    %v59 = vsel %vm57, %v45, 0
    %61 = vmatprep.subr.mxu0 0.0
    %62 = vmatpush1.msra.mxu0 %v41
    %63 = vmatprep.subr.mxu0 0.0
    %64 = vmatpush1.msra.mxu0 %v42
    %65 = vmatprep.subr.mxu0 0.0
    %66 = vmatpush1.msra.mxu0 %v43
    %67 = vmatprep.subr.mxu0 0.0
    %68 = vmatpush1.msra.mxu0 %v44
    %69 = vmatprep.subr.mxu0 0.0
    %70 = vmatpush1.msra.mxu0 %v59
    %71 = vmatprep.subr.mxu0 0.0
    %72 = vmatpush1.msra.mxu0 0.0
    %73 = vmatprep.subr.mxu0 0.0
    %74 = vmatpush1.msra.mxu0 0.0
    %75 = vmatprep.subr.mxu0 0.0
    %76 = vmatpush1.msra.mxu0 0.0
    %77 = vmatprep.subr.mxu0 0.0
    %78 = vmatpush1.msra.mxu0 0.0
    %79 = vmatprep.subr.mxu0 0.0
    %80 = vmatpush1.msra.mxu0 0.0
    %81 = vmatprep.subr.mxu0 0.0
    %82 = vmatpush1.msra.mxu0 0.0
    %83 = vmatprep.subr.mxu0 0.0
    %84 = vmatpush1.msra.mxu0 0.0
    %85 = vmatprep.subr.mxu0 0.0
    %86 = vmatpush1.msra.mxu0 0.0
    %87 = vmatprep.subr.mxu0 0.0
    %88 = vmatpush1.msra.mxu0 0.0
    %89 = vmatprep.subr.mxu0 0.0
    %90 = vmatpush1.msra.mxu0 0.0
    %91 = vmatprep.subr.mxu0 0.0
    %92 = vmatpush1.msra.mxu0 0.0
    %93 = vmatprep.subr.mxu0 0.0
    %94 = vmatpush1.msra.mxu0 0.0
    %95 = vmatprep.subr.mxu0 0.0
    %96 = vmatpush1.msra.mxu0 0.0
    %97 = vmatprep.subr.mxu0 0.0
    %98 = vmatpush1.msra.mxu0 0.0
    %99 = vmatprep.subr.mxu0 0.0
    %100 = vmatpush1.msra.mxu0 0.0
    %101 = vmatprep.subr.mxu0 0.0
    %102 = vmatpush1.msra.mxu0 0.0
    %103 = vmatprep.subr.mxu0 0.0
    %104 = vmatpush1.msra.mxu0 0.0
    %105 = vmatprep.subr.mxu0 0.0
    %106 = vmatpush1.msra.mxu0 0.0
    %107 = vmatprep.subr.mxu0 0.0
    %108 = vmatpush1.msra.mxu0 0.0
    %109 = vmatprep.subr.mxu0 0.0
    %110 = vmatpush1.msra.mxu0 0.0
    %111 = vmatprep.subr.mxu0 0.0
    %112 = vmatpush1.msra.mxu0 0.0
    %113 = vmatprep.subr.mxu0 0.0
    %114 = vmatpush1.msra.mxu0 0.0
    %115 = vmatprep.subr.mxu0 0.0
    %116 = vmatpush1.msra.mxu0 0.0
    %117 = vmatprep.subr.mxu0 0.0
    %118 = vmatpush1.msra.mxu0 0.0
    %119 = vmatprep.subr.mxu0 0.0
    %120 = vmatpush1.msra.mxu0 0.0
    %121 = vmatprep.subr.mxu0 0.0
    %122 = vmatpush1.msra.mxu0 0.0
    %123 = vmatprep.subr.mxu0 0.0
    %124 = vmatpush1.msra.mxu0 0.0
    %125 = vmatprep.mubr.f32.mxu0 0.0
    %126 = vmatmul.mubr.f32.gmra.mrb[0].mxu0 %v55
    %v127 = vpop.f32.mrb[0].mxu0
    %v128 = vadd.f32 %v51, %v127
    %v129 = vpop.f32.mrb[0].mxu0
    %130 = vdwg.mxu0
    %v131 = vmax.f32 %v128, 0.0
    %v132 = vld [vmem:[%s3] sm:$0xff]
    %v133 = vld [vmem:[%s3 + $0x8] sm:$0xff]
    %v134 = vld [vmem:[%s3 + $0x10] sm:$0xff]
    %v135 = vld [vmem:[%s3 + $0x18] sm:$0xff]
    %v136 = vld [vmem:[%s3 + $0x20] sm:$0xff]
    %v137 = vld [vmem:[%s3 + $0x28] sm:$0xff]
    %v138 = vld [vmem:[%s3 + $0x30] sm:$0xff]
    %v139 = vld [vmem:[%s3 + $0x38] sm:$0xff]
    %v140 = vld [vmem:[%s3 + $0x40] sm:$0xff]
    %v141 = vld [vmem:[%s3 + $0x48] sm:$0xff]
    %v142 = vld [vmem:[%s3 + $0x50] sm:$0xff]
    %v143 = vld [vmem:[%s3 + $0x58] sm:$0xff]
    %v144 = vld [vmem:[%s3 + $0x60] sm:$0xff]
    %v145 = vld [vmem:[%s3 + $0x68] sm:$0xff]
    %v146 = vld [vmem:[%s3 + $0x70] sm:$0xff]
    %v147 = vld [vmem:[%s3 + $0x78] sm:$0xff]
    %v148 = vld [vmem:[%s4] sm:$0x1]
    %v150 = vlaneseq
    %v151 = vshrl.u32 %v150, 7
    %v152 = vsub.s32 0, %v151
    %v153 = vrot.slane %v148, %v152
    %155 = vmatprep.subr.mxu0 0.0
    %156 = vmatpush1.msra.mxu0 %v132
    %157 = vmatprep.subr.mxu0 0.0
    %158 = vmatpush1.msra.mxu0 %v133
    %159 = vmatprep.subr.mxu0 0.0
    %160 = vmatpush1.msra.mxu0 %v134
    %161 = vmatprep.subr.mxu0 0.0
    %162 = vmatpush1.msra.mxu0 %v135
    %163 = vmatprep.subr.mxu0 0.0
    %164 = vmatpush1.msra.mxu0 %v136
    %165 = vmatprep.subr.mxu0 0.0
    %166 = vmatpush1.msra.mxu0 %v137
    %167 = vmatprep.subr.mxu0 0.0
    %168 = vmatpush1.msra.mxu0 %v138
    %169 = vmatprep.subr.mxu0 0.0
    %170 = vmatpush1.msra.mxu0 %v139
    %171 = vmatprep.subr.mxu0 0.0
    %172 = vmatpush1.msra.mxu0 %v140
    %173 = vmatprep.subr.mxu0 0.0
    %174 = vmatpush1.msra.mxu0 %v141
    %175 = vmatprep.subr.mxu0 0.0
    %176 = vmatpush1.msra.mxu0 %v142
    %177 = vmatprep.subr.mxu0 0.0
    %178 = vmatpush1.msra.mxu0 %v143
    %179 = vmatprep.subr.mxu0 0.0
    %180 = vmatpush1.msra.mxu0 %v144
    %181 = vmatprep.subr.mxu0 0.0
    %182 = vmatpush1.msra.mxu0 %v145
    %183 = vmatprep.subr.mxu0 0.0
    %184 = vmatpush1.msra.mxu0 %v146
    %185 = vmatprep.subr.mxu0 0.0
    %186 = vmatpush1.msra.mxu0 %v147
    %187 = vmatprep.subr.mxu0 0.0
    %188 = vmatpush1.msra.mxu0 0.0
    %189 = vmatprep.subr.mxu0 0.0
    %190 = vmatpush1.msra.mxu0 0.0
    %191 = vmatprep.subr.mxu0 0.0
    %192 = vmatpush1.msra.mxu0 0.0
    %193 = vmatprep.subr.mxu0 0.0
    %194 = vmatpush1.msra.mxu0 0.0
    %195 = vmatprep.subr.mxu0 0.0
    %196 = vmatpush1.msra.mxu0 0.0
    %197 = vmatprep.subr.mxu0 0.0
    %198 = vmatpush1.msra.mxu0 0.0
    %199 = vmatprep.subr.mxu0 0.0
    %200 = vmatpush1.msra.mxu0 0.0
    %201 = vmatprep.subr.mxu0 0.0
    %202 = vmatpush1.msra.mxu0 0.0
    %203 = vmatprep.subr.mxu0 0.0
    %204 = vmatpush1.msra.mxu0 0.0
    %205 = vmatprep.subr.mxu0 0.0
    %206 = vmatpush1.msra.mxu0 0.0
    %207 = vmatprep.subr.mxu0 0.0
    %208 = vmatpush1.msra.mxu0 0.0
    %209 = vmatprep.subr.mxu0 0.0
    %210 = vmatpush1.msra.mxu0 0.0
    %211 = vmatprep.subr.mxu0 0.0
    %212 = vmatpush1.msra.mxu0 0.0
    %213 = vmatprep.subr.mxu0 0.0
    %214 = vmatpush1.msra.mxu0 0.0
    %215 = vmatprep.subr.mxu0 0.0
    %216 = vmatpush1.msra.mxu0 0.0
    %217 = vmatprep.subr.mxu0 0.0
    %218 = vmatpush1.msra.mxu0 0.0
    %219 = vmatprep.mubr.f32.mxu0 0.0
    %220 = vmatmul.mubr.f32.gmra.mrb[0].mxu0 %v131
    %v221 = vpop.f32.mrb[0].mxu0
    %v222 = vadd.f32 %v153, %v221
    %v223 = vpop.f32.mrb[0].mxu0
    %224 = vdwg.mxu0
    %v225 = vmax.f32 %v222, 0.0
    %v226 = vld [vmem:[%s5] sm:$0xff]
    %v227 = vld [vmem:[%s5 + $0x8] sm:$0xff]
    %v228 = vld [vmem:[%s5 + $0x10] sm:$0xff]
    %v229 = vld [vmem:[%s5 + $0x18] sm:$0xff]
    %v230 = vld [vmem:[%s5 + $0x20] sm:$0xff]
    %v231 = vld [vmem:[%s5 + $0x28] sm:$0xff]
    %v232 = vld [vmem:[%s5 + $0x30] sm:$0xff]
    %v233 = vld [vmem:[%s5 + $0x38] sm:$0xff]
    %v234 = vld [vmem:[%s5 + $0x40] sm:$0xff]
    %v235 = vld [vmem:[%s5 + $0x48] sm:$0xff]
    %v236 = vld [vmem:[%s5 + $0x50] sm:$0xff]
    %v237 = vld [vmem:[%s5 + $0x58] sm:$0xff]
    %v238 = vld [vmem:[%s5 + $0x60] sm:$0xff]
    %v239 = vld [vmem:[%s5 + $0x68] sm:$0xff]
    %v240 = vld [vmem:[%s5 + $0x70] sm:$0xff]
    %v241 = vld [vmem:[%s5 + $0x78] sm:$0xff]
    %v242 = vld [vmem:[%s6] sm:$0x1]
    %v244 = vlaneseq
    %v245 = vshrl.u32 %v244, 7
    %v246 = vsub.s32 0, %v245
    %v247 = vrot.slane %v242, %v246
    %249 = vmatprep.subr.mxu0 0.0
    %250 = vmatpush1.msra.mxu0 %v226
    %251 = vmatprep.subr.mxu0 0.0
    %252 = vmatpush1.msra.mxu0 %v227
    %253 = vmatprep.subr.mxu0 0.0
    %254 = vmatpush1.msra.mxu0 %v228
    %255 = vmatprep.subr.mxu0 0.0
    %256 = vmatpush1.msra.mxu0 %v229
    %257 = vmatprep.subr.mxu0 0.0
    %258 = vmatpush1.msra.mxu0 %v230
    %259 = vmatprep.subr.mxu0 0.0
    %260 = vmatpush1.msra.mxu0 %v231
    %261 = vmatprep.subr.mxu0 0.0
    %262 = vmatpush1.msra.mxu0 %v232
    %263 = vmatprep.subr.mxu0 0.0
    %264 = vmatpush1.msra.mxu0 %v233
    %265 = vmatprep.subr.mxu0 0.0
    %266 = vmatpush1.msra.mxu0 %v234
    %267 = vmatprep.subr.mxu0 0.0
    %268 = vmatpush1.msra.mxu0 %v235
    %269 = vmatprep.subr.mxu0 0.0
    %270 = vmatpush1.msra.mxu0 %v236
    %271 = vmatprep.subr.mxu0 0.0
    %272 = vmatpush1.msra.mxu0 %v237
    %273 = vmatprep.subr.mxu0 0.0
    %274 = vmatpush1.msra.mxu0 %v238
    %275 = vmatprep.subr.mxu0 0.0
    %276 = vmatpush1.msra.mxu0 %v239
    %277 = vmatprep.subr.mxu0 0.0
    %278 = vmatpush1.msra.mxu0 %v240
    %279 = vmatprep.subr.mxu0 0.0
    %280 = vmatpush1.msra.mxu0 %v241
    %281 = vmatprep.subr.mxu0 0.0
    %282 = vmatpush1.msra.mxu0 0.0
    %283 = vmatprep.subr.mxu0 0.0
    %284 = vmatpush1.msra.mxu0 0.0
    %285 = vmatprep.subr.mxu0 0.0
    %286 = vmatpush1.msra.mxu0 0.0
    %287 = vmatprep.subr.mxu0 0.0
    %288 = vmatpush1.msra.mxu0 0.0
    %289 = vmatprep.subr.mxu0 0.0
    %290 = vmatpush1.msra.mxu0 0.0
    %291 = vmatprep.subr.mxu0 0.0
    %292 = vmatpush1.msra.mxu0 0.0
    %293 = vmatprep.subr.mxu0 0.0
    %294 = vmatpush1.msra.mxu0 0.0
    %295 = vmatprep.subr.mxu0 0.0
    %296 = vmatpush1.msra.mxu0 0.0
    %297 = vmatprep.subr.mxu0 0.0
    %298 = vmatpush1.msra.mxu0 0.0
    %299 = vmatprep.subr.mxu0 0.0
    %300 = vmatpush1.msra.mxu0 0.0
    %301 = vmatprep.subr.mxu0 0.0
    %302 = vmatpush1.msra.mxu0 0.0
    %303 = vmatprep.subr.mxu0 0.0
    %304 = vmatpush1.msra.mxu0 0.0
    %305 = vmatprep.subr.mxu0 0.0
    %306 = vmatpush1.msra.mxu0 0.0
    %307 = vmatprep.subr.mxu0 0.0
    %308 = vmatpush1.msra.mxu0 0.0
    %309 = vmatprep.subr.mxu0 0.0
    %310 = vmatpush1.msra.mxu0 0.0
    %311 = vmatprep.subr.mxu0 0.0
    %312 = vmatpush1.msra.mxu0 0.0
    %313 = vmatprep.mubr.f32.mxu0 0.0
    %314 = vmatmul.mubr.f32.gmra.mrb[0].mxu0 %v225
    %v315 = vpop.f32.mrb[0].mxu0
    %v316 = vadd.f32 %v247, %v315
    %v317 = vpop.f32.mrb[0].mxu0
    %318 = vdwg.mxu0
    %vm319 = vcmask 31744
    %320 = vst.msk [vmem:[%s7] sm:$0xff] %vm319, %v316
    // Predicated region
    $region34: #{mamlp_forward.1} parent=1 // pred_check
      _
    $region35: #{mamlp_forward.1} parent=1 // pred_check_branch
      %322 = sbr.rel (0) target = $region37
    $region36: #{mamlp_forward.1} parent=1 // pred_region
      _
    $region37: #{mamlp_forward.1} parent=1 // pred_fallthru
      _
    // Predicated region
    $region38: #{mamlp_forward.1} parent=1 // pred_check
      _
    $region39: #{mamlp_forward.1} parent=1 // pred_check_branch
      %324 = sbr.rel (0) target = $region41
    $region40: #{mamlp_forward.1} parent=1 // pred_region
      _
    $region41: #{mamlp_forward.1} parent=1 // pred_fallthru
      _
    %325 = vsyncpa [#allocation3], 1

</llo_original>
